<compile_context>
chip_gen: v5e
topology: v5e:2x2
jax: 0.10.0
libtpu: 0.0.40
codegen_flags: <defaults>
</compile_context>

<pallas_src>
import functools

import jax
import jax.numpy as jnp
from jax.experimental import pallas as pl
from jax.experimental.pallas import tpu as pltpu

N_EMBD = 32
DROPOUT_P = 0.2


def _round_up(x, m):
    return ((x + m - 1) // m) * m


def _ffn_kernel(*refs, dropout_p, training):
    # refs: x, w1, b1, w2, b2, [u], o
    if training:
        x_ref, w1_ref, b1_ref, w2_ref, b2_ref, u_ref, o_ref = refs
    else:
        x_ref, w1_ref, b1_ref, w2_ref, b2_ref, o_ref = refs
        u_ref = None

    # Linear 1 + ReLU.  MXU matmul with f32 accumulation; all elementwise
    # work stays in f32 (v5e VPU/EUP have no bf16 support).
    h = jnp.dot(x_ref[...], w1_ref[...], preferred_element_type=jnp.float32)
    h = jnp.maximum(h + b1_ref[...].astype(jnp.float32), 0.0)

    # Linear 2 (projection).  Downcast the activation to the weight dtype so
    # bf16 weights hit the dense MXU path (identity when everything is f32).
    out = jnp.dot(h.astype(w2_ref.dtype), w2_ref[...],
                  preferred_element_type=jnp.float32)
    out = out + b2_ref[...].astype(jnp.float32)

    # Inverted dropout (training only), applied on the f32 accumulator.
    if training:
        keep = u_ref[...] >= dropout_p
        out = jnp.where(keep, out * (1.0 / (1.0 - dropout_p)), 0.0)

    # TODO(synk): with C=32 the store is a 25%-lane-occupancy masked vst; a
    # lane-dense (TILE_M/4, 128) output view would need an in-kernel
    # sublane->lane reshape that Mosaic does not reliably support, so we keep
    # the contiguous (TILE_M, 32) store (HBM writeback is still contiguous).
    o_ref[...] = out.astype(o_ref.dtype)


def feedforward_pallas(x, w1, b1, w2, b2, *, dropout_p=DROPOUT_P,
                       training=False, rng_key=None):
    B, T, C = x.shape
    H = w1.shape[1]          # 4 * n_embd
    M = B * T

    # PyTorch Dropout(p>=1) zeroes everything; avoid the 1/(1-p) blow-up.
    if training and dropout_p >= 1.0:
        return jnp.zeros_like(x)
    apply_dropout = bool(training and dropout_p > 0.0)

    # Large M-tile (up to 512 rows); keep >= 2 grid steps when possible so a
    # two-TensorCore chip (v7x) can split the 'parallel' grid axis.
    TILE_M = max(8, min(512, _round_up(pl.cdiv(M, 2), 8)))
    M_pad = _round_up(M, TILE_M)

    x2 = x.reshape(M, C)
    if M_pad != M:
        x2 = jnp.pad(x2, ((0, M_pad - M), (0, 0)))

    inputs = [x2, w1, b1.reshape(1, H), w2, b2.reshape(1, C)]
    in_specs = [
        pl.BlockSpec((TILE_M, C), lambda i: (i, 0)),   # x rows (streamed)
        pl.BlockSpec((C, H), lambda i: (0, 0)),        # W1 (VMEM-resident)
        pl.BlockSpec((1, H), lambda i: (0, 0)),        # b1
        pl.BlockSpec((H, C), lambda i: (0, 0)),        # W2 (VMEM-resident)
        pl.BlockSpec((1, C), lambda i: (0, 0)),        # b2
    ]

    if apply_dropout:
        if rng_key is None:
            rng_key = jax.random.PRNGKey(0)
        # Uniform randoms streamed per-tile (the TPU hardware PRNG primitives
        # have no interpret/CPU lowering, so the mask is made host-side).
        u = jax.random.uniform(rng_key, (M_pad, C), dtype=jnp.float32)
        inputs.append(u)
        in_specs.append(pl.BlockSpec((TILE_M, C), lambda i: (i, 0)))

    kernel = functools.partial(_ffn_kernel, dropout_p=float(dropout_p),
                               training=apply_dropout)

    out = pl.pallas_call(
        kernel,
        out_shape=jax.ShapeDtypeStruct((M_pad, C), x.dtype),
        grid=(M_pad // TILE_M,),
        in_specs=in_specs,
        out_specs=pl.BlockSpec((TILE_M, C), lambda i: (i, 0)),
        compiler_params=pltpu.CompilerParams(
            dimension_semantics=("parallel",)),
    )(*inputs)

    return out[:M].reshape(B, T, C)


def feedforward_ref(x, w1, b1, w2, b2):
    # Pure-JAX reference (eval mode: dropout = identity).
    h = jnp.maximum(x @ w1 + b1, 0.0)
    return h @ w2 + b2


if __name__ == "__main__":
    key = jax.random.PRNGKey(0)
    kx, k1, k2, k3, k4, kd = jax.random.split(key, 6)

    B, T, C = 2, 8, N_EMBD
    H = 4 * C

    x = jax.random.normal(kx, (B, T, C), dtype=jnp.float32)

    # PyTorch-style init: U(-1/sqrt(fan_in), 1/sqrt(fan_in))
    lim1 = 1.0 / (C ** 0.5)
    lim2 = 1.0 / (H ** 0.5)
    w1 = jax.random.uniform(k1, (C, H), jnp.float32, -lim1, lim1)
    b1 = jax.random.uniform(k2, (H,), jnp.float32, -lim1, lim1)
    w2 = jax.random.uniform(k3, (H, C), jnp.float32, -lim2, lim2)
    b2 = jax.random.uniform(k4, (C,), jnp.float32, -lim2, lim2)

    ref = feedforward_ref(x, w1, b1, w2, b2)

    # Eval path (deterministic).  Tolerance allows for possible bf16-pass MXU
    # f32 matmuls on real hardware vs. the XLA reference.
    out_eval = jax.block_until_ready(
        feedforward_pallas(x, w1, b1, w2, b2, training=False))
    assert out_eval.shape == (B, T, C)
    assert jnp.allclose(out_eval, ref, atol=1e-2, rtol=1e-2)

    # Training path: every element is either dropped (exact 0) or equals the
    # eval output scaled by 1/(1-p); drop fraction should be near p=0.2.
    out_train = jax.block_until_ready(
        feedforward_pallas(x, w1, b1, w2, b2, training=True, rng_key=kd))
    assert out_train.shape == (B, T, C)
    scaled = ref / (1.0 - DROPOUT_P)
    err = jnp.where(out_train == 0.0, 0.0, out_train - scaled)
    assert jnp.allclose(err, 0.0, atol=2e-2)
    drop_frac = float(jnp.mean((out_train == 0.0).astype(jnp.float32)))
    assert 0.02 < drop_frac < 0.5, drop_frac

    # bf16 streaming path (halves HBM traffic; f32 accumulate inside kernel).
    out_bf16 = jax.block_until_ready(
        feedforward_pallas(x.astype(jnp.bfloat16), w1.astype(jnp.bfloat16),
                           b1.astype(jnp.bfloat16), w2.astype(jnp.bfloat16),
                           b2.astype(jnp.bfloat16), training=False))
    assert out_bf16.shape == (B, T, C)
    assert bool(jnp.all(jnp.isfinite(out_bf16.astype(jnp.float32))))

    print("KERNEL_OK")
</pallas_src>

<mosaic_0001>
module attributes {stable_mosaic.version = 11 : i64} {
  func.func @_ffn_kernel(%arg0: i32, %arg1: memref<8x32xf32, #tpu.memory_space<vmem>>, %arg2: memref<32x128xf32, #tpu.memory_space<vmem>>, %arg3: memref<1x128xf32, #tpu.memory_space<vmem>>, %arg4: memref<128x32xf32, #tpu.memory_space<vmem>>, %arg5: memref<1x32xf32, #tpu.memory_space<vmem>>, %arg6: memref<8x32xf32, #tpu.memory_space<vmem>>) attributes {dimension_semantics = [#tpu.dimension_semantics<parallel>], iteration_bounds = array<i64: 2>, scalar_prefetch = 0 : i64, scratch_operands = 0 : i64, tpu.core_type = #tpu.core_type<tc>, window_params = [{transform_indices = @transform_0, window_bounds = array<i64: 8, 32>}, {pipeline_mode = #tpu.pipeline_mode<synchronous>, transform_indices = @transform_1, window_bounds = array<i64: 32, 128>}, {pipeline_mode = #tpu.pipeline_mode<synchronous>, transform_indices = @transform_2, window_bounds = array<i64: 1, 128>}, {pipeline_mode = #tpu.pipeline_mode<synchronous>, transform_indices = @transform_3, window_bounds = array<i64: 128, 32>}, {pipeline_mode = #tpu.pipeline_mode<synchronous>, transform_indices = @transform_4, window_bounds = array<i64: 1, 32>}, {transform_indices = @transform_5, window_bounds = array<i64: 8, 32>}]} {
    %c0 = arith.constant 0 : index
    %c0_0 = arith.constant 0 : index
    %0 = vector.load %arg1[%c0, %c0_0] : memref<8x32xf32, #tpu.memory_space<vmem>>, vector<8x32xf32>
    %c0_1 = arith.constant 0 : index
    %c0_2 = arith.constant 0 : index
    %1 = vector.load %arg2[%c0_1, %c0_2] : memref<32x128xf32, #tpu.memory_space<vmem>>, vector<32x128xf32>
    %cst = arith.constant dense<0.000000e+00> : vector<8x128xf32>
    %2 = tpu.matmul %0, %1, %cst {dimension_numbers = #tpu.dot_dimension_numbers<[1], [0], [0], [1], [0, 0, 1, 1], [], []>} : vector<8x32xf32>, vector<32x128xf32>, vector<8x128xf32> -> vector<8x128xf32>
    %c0_3 = arith.constant 0 : index
    %c0_4 = arith.constant 0 : index
    %3 = vector.load %arg3[%c0_3, %c0_4] : memref<1x128xf32, #tpu.memory_space<vmem>>, vector<1x128xf32>
    %4 = vector.broadcast %3 : vector<1x128xf32> to vector<8x128xf32>
    %5 = arith.addf %2, %4 : vector<8x128xf32>
    %cst_5 = arith.constant 0.000000e+00 : f32
    %6 = vector.broadcast %cst_5 : f32 to vector<8x128xf32>
    %7 = arith.maximumf %5, %6 : vector<8x128xf32>
    %c0_6 = arith.constant 0 : index
    %c0_7 = arith.constant 0 : index
    %8 = vector.load %arg4[%c0_6, %c0_7] : memref<128x32xf32, #tpu.memory_space<vmem>>, vector<128x32xf32>
    %cst_8 = arith.constant dense<0.000000e+00> : vector<8x32xf32>
    %9 = tpu.matmul %7, %8, %cst_8 {dimension_numbers = #tpu.dot_dimension_numbers<[1], [0], [0], [1], [0, 0, 1, 1], [], []>} : vector<8x128xf32>, vector<128x32xf32>, vector<8x32xf32> -> vector<8x32xf32>
    %c0_9 = arith.constant 0 : index
    %c0_10 = arith.constant 0 : index
    %10 = vector.load %arg5[%c0_9, %c0_10] : memref<1x32xf32, #tpu.memory_space<vmem>>, vector<1x32xf32>
    %11 = vector.broadcast %10 : vector<1x32xf32> to vector<8x32xf32>
    %12 = arith.addf %9, %11 : vector<8x32xf32>
    %c0_11 = arith.constant 0 : index
    %c0_12 = arith.constant 0 : index
    %13 = vector.load %arg6[%c0_11, %c0_12] : memref<8x32xf32, #tpu.memory_space<vmem>>, vector<8x32xf32>
    tpu.vector_store %arg6[%c0_11, %c0_12], %12 {strides = array<i32>} : memref<8x32xf32, #tpu.memory_space<vmem>>, vector<8x32xf32>,
    return
  }
  func.func @transform_0(%arg0: i32) -> (i32, i32) {
    %c0_i32 = arith.constant 0 : i32
    %c0_i32_0 = arith.constant 0 : i32
    return %arg0, %c0_i32 : i32, i32
  }
  func.func @transform_1(%arg0: i32) -> (i32, i32) {
    %c0_i32 = arith.constant 0 : i32
    %c0_i32_0 = arith.constant 0 : i32
    %c0_i32_1 = arith.constant 0 : i32
    return %c0_i32, %c0_i32_0 : i32, i32
  }
  func.func @transform_2(%arg0: i32) -> (i32, i32) {
    %c0_i32 = arith.constant 0 : i32
    %c0_i32_0 = arith.constant 0 : i32
    %c0_i32_1 = arith.constant 0 : i32
    return %c0_i32, %c0_i32_0 : i32, i32
  }
  func.func @transform_3(%arg0: i32) -> (i32, i32) {
    %c0_i32 = arith.constant 0 : i32
    %c0_i32_0 = arith.constant 0 : i32
    %c0_i32_1 = arith.constant 0 : i32
    return %c0_i32, %c0_i32_0 : i32, i32
  }
  func.func @transform_4(%arg0: i32) -> (i32, i32) {
    %c0_i32 = arith.constant 0 : i32
    %c0_i32_0 = arith.constant 0 : i32
    %c0_i32_1 = arith.constant 0 : i32
    return %c0_i32, %c0_i32_0 : i32, i32
  }
  func.func @transform_5(%arg0: i32) -> (i32, i32) {
    %c0_i32 = arith.constant 0 : i32
    %c0_i32_0 = arith.constant 0 : i32
    return %arg0, %c0_i32 : i32, i32
  }
}

</mosaic_0001>

<llo_original>
// kernel: tpu_custom_call.1
$region0: #{tpu_custom_call.1}
  #allocation0 [shape = 'u32[]', space=smem, size = 0x4, offset = 0x4, fixed_abs, tag = 'smem constant byte address 0x4 - core index']
  #allocation1 [shape = 'u32[72,128]{1,0:T(1,128)}', space=vmem, size = 0x9000, scoped, tag = 'internal scratch']
  %s0 = inlined_call_operand.vmem [shape: f32[16,32], index: 0, kind: input, shape index: {}]
  %s1 = inlined_call_operand.vmem [shape: f32[32,128], index: 1, kind: input, shape index: {}]
  %s2 = inlined_call_operand.vmem [shape: f32[1,128], index: 2, kind: input, shape index: {}]
  %s3 = inlined_call_operand.vmem [shape: f32[128,32], index: 3, kind: input, shape index: {}]
  %s4 = inlined_call_operand.vmem [shape: f32[1,32], index: 4, kind: input, shape index: {}]
  %s5 = inlined_call_operand.hbm [shape: f32[16,32], index: 5, kind: output, shape index: {}]
  %s6 = sld [smem:[#allocation0]]
  $region53: #{tpu_custom_call.1} parent=0
    _
  %s8 = ssub.s32 1, %s6
  %s9 = scalar_select 0, %s8, %s6
  $region1: #{tpu_custom_call.1} parent=0
    #allocation2 [shape = 'u8[8192]{0}', space=vmem, size = 0x2000, scoped, tag = 'output window, operand 0']
    #allocation3 [shape = 's32[2]{0}', space=sflag, size = 0x8, scoped, tag = 'scoped memory for tpu_custom_call.1']
    %10 = vsyncpa [#allocation3], 0
    %s11 = scalar_lea.sflag [#allocation3], 1
    %12 = vsyncpa %s11, 0
    loop: start=0, step=1, limit=4
    $region2: #{tpu_custom_call.1} parent=1 // loop_pre_header
      _
    $region3: #{tpu_custom_call.1} parent=1 // loop_header
      %s14 = sphi 0, %s18
      %p15 = scmp.ge.s32.totalorder %s14, 4
      %s24 = sphi 0, %s26
      %s27 = sphi 0, %s24
      %s28 = sphi 0, %s27
      %s44 = sphi 0, %s28
      %s48 = sphi 0, %s48
      %s50 = sphi 0, %s48
      %s51 = sphi 0, %s50
      %s65 = sphi 0, %s51
      %s69 = sphi 0, %s69
      %s71 = sphi 0, %s69
      %s72 = sphi 0, %s71
      %s86 = sphi 0, %s72
      %s90 = sphi 0, %s90
      %s92 = sphi 0, %s90
      %s93 = sphi 0, %s92
      %s107 = sphi 0, %s93
      %s111 = sphi 0, %s111
      %s113 = sphi 0, %s111
      %s114 = sphi 0, %s113
      %s128 = sphi 0, %s114
      %s134 = sphi 0, %s136
      %s137 = sphi 0, %s134
      %s138 = sphi 0, %s137
      %s154 = sphi 0, %s138
    $region4: #{tpu_custom_call.1} parent=1 // loop_header_branch
      %17 = sbr.rel (%p15) target = $region8
    $region5: #{tpu_custom_call.1} parent=1 // loop_body
      %s19 = ssub.s32 %s14, 1
      %s20 = ssub.s32 %s14, 2
      %s21 = sadd.s32 %s14, 1
      %s22 = ssub.s32 %s14, %s21
      %p23 = scmp.eq.s32.totalorder %s22, 0
      %s25 = sadd.s32 %s24, 1
      %s26 = scalar_select %p23, %s24, %s25
      %p29 = pneg %p23
      %p30 = scmp.eq.s32.totalorder %s14, 1
      %p31 = por %p29, %p30
      %p32 = scmp.ne.s32.totalorder %s24, %s27
      %p33 = scmp.eq.s32.totalorder %s14, 0
      %p34 = por %p32, %p33
      %p35 = scmp.ne.s32.totalorder %s24, %s27
      %p36 = scmp.eq.s32.totalorder %s19, 1
      %p37 = por %p35, %p36
      %p38 = scmp.ne.s32.totalorder %s27, %s28
      %p39 = scmp.eq.s32.totalorder %s19, 0
      %p40 = por %p38, %p39
      %p41 = scmp.ne.s32.totalorder %s27, %s28
      %p42 = scmp.eq.s32.totalorder %s20, 1
      %p43 = por %p41, %p42
      %p45 = scmp.ne.s32.totalorder %s28, %s44
      %p46 = scmp.eq.s32.totalorder %s20, 0
      %p47 = por %p45, %p46
      %s49 = sadd.s32 %s48, 1
      %p52 = scmp.eq.s32.totalorder %s14, 1
      %p53 = scmp.ne.s32.totalorder %s48, %s50
      %p54 = scmp.eq.s32.totalorder %s14, 0
      %p55 = por %p53, %p54
      %p56 = scmp.ne.s32.totalorder %s48, %s50
      %p57 = scmp.eq.s32.totalorder %s19, 1
      %p58 = por %p56, %p57
      %p59 = scmp.ne.s32.totalorder %s50, %s51
      %p60 = scmp.eq.s32.totalorder %s19, 0
      %p61 = por %p59, %p60
      %p62 = scmp.ne.s32.totalorder %s50, %s51
      %p63 = scmp.eq.s32.totalorder %s20, 1
      %p64 = por %p62, %p63
      %p66 = scmp.ne.s32.totalorder %s51, %s65
      %p67 = scmp.eq.s32.totalorder %s20, 0
      %p68 = por %p66, %p67
      %s70 = sadd.s32 %s69, 1
      %p73 = scmp.eq.s32.totalorder %s14, 1
      %p74 = scmp.ne.s32.totalorder %s69, %s71
      %p75 = scmp.eq.s32.totalorder %s14, 0
      %p76 = por %p74, %p75
      %p77 = scmp.ne.s32.totalorder %s69, %s71
      %p78 = scmp.eq.s32.totalorder %s19, 1
      %p79 = por %p77, %p78
      %p80 = scmp.ne.s32.totalorder %s71, %s72
      %p81 = scmp.eq.s32.totalorder %s19, 0
      %p82 = por %p80, %p81
      %p83 = scmp.ne.s32.totalorder %s71, %s72
      %p84 = scmp.eq.s32.totalorder %s20, 1
      %p85 = por %p83, %p84
      %p87 = scmp.ne.s32.totalorder %s72, %s86
      %p88 = scmp.eq.s32.totalorder %s20, 0
      %p89 = por %p87, %p88
      %s91 = sadd.s32 %s90, 1
      %p94 = scmp.eq.s32.totalorder %s14, 1
      %p95 = scmp.ne.s32.totalorder %s90, %s92
      %p96 = scmp.eq.s32.totalorder %s14, 0
      %p97 = por %p95, %p96
      %p98 = scmp.ne.s32.totalorder %s90, %s92
      %p99 = scmp.eq.s32.totalorder %s19, 1
      %p100 = por %p98, %p99
      %p101 = scmp.ne.s32.totalorder %s92, %s93
      %p102 = scmp.eq.s32.totalorder %s19, 0
      %p103 = por %p101, %p102
      %p104 = scmp.ne.s32.totalorder %s92, %s93
      %p105 = scmp.eq.s32.totalorder %s20, 1
      %p106 = por %p104, %p105
      %p108 = scmp.ne.s32.totalorder %s93, %s107
      %p109 = scmp.eq.s32.totalorder %s20, 0
      %p110 = por %p108, %p109
      %s112 = sadd.s32 %s111, 1
      %p115 = scmp.eq.s32.totalorder %s14, 1
      %p116 = scmp.ne.s32.totalorder %s111, %s113
      %p117 = scmp.eq.s32.totalorder %s14, 0
      %p118 = por %p116, %p117
      %p119 = scmp.ne.s32.totalorder %s111, %s113
      %p120 = scmp.eq.s32.totalorder %s19, 1
      %p121 = por %p119, %p120
      %p122 = scmp.ne.s32.totalorder %s113, %s114
      %p123 = scmp.eq.s32.totalorder %s19, 0
      %p124 = por %p122, %p123
      %p125 = scmp.ne.s32.totalorder %s113, %s114
      %p126 = scmp.eq.s32.totalorder %s20, 1
      %p127 = por %p125, %p126
      %p129 = scmp.ne.s32.totalorder %s114, %s128
      %p130 = scmp.eq.s32.totalorder %s20, 0
      %p131 = por %p129, %p130
      %s132 = ssub.s32 %s14, %s21
      %p133 = scmp.eq.s32.totalorder %s132, 0
      %s135 = sadd.s32 %s134, 1
      %s136 = scalar_select %p133, %s134, %s135
      %p139 = pneg %p133
      %p140 = scmp.eq.s32.totalorder %s14, 1
      %p141 = por %p139, %p140
      %p142 = scmp.ne.s32.totalorder %s134, %s137
      %p143 = scmp.eq.s32.totalorder %s14, 0
      %p144 = por %p142, %p143
      %p145 = scmp.ne.s32.totalorder %s134, %s137
      %p146 = scmp.eq.s32.totalorder %s19, 1
      %p147 = por %p145, %p146
      %p148 = scmp.ne.s32.totalorder %s137, %s138
      %p149 = scmp.eq.s32.totalorder %s19, 0
      %p150 = por %p148, %p149
      %p151 = scmp.ne.s32.totalorder %s137, %s138
      %p152 = scmp.eq.s32.totalorder %s20, 1
      %p153 = por %p151, %p152
      %p155 = scmp.ne.s32.totalorder %s138, %s154
      %p156 = scmp.eq.s32.totalorder %s20, 0
      %p157 = por %p155, %p156
      %p158 = scmp.le.s32.totalorder 1, %s14
      %p159 = scmp.lt.s32.totalorder %s14, 3
      %p160 = pnand %p158, %p159
      %p161 = pneg %p160
      // Predicated region
      $region9: #{tpu_custom_call.1} parent=5 // pred_check
        _
      $region10: #{tpu_custom_call.1} parent=5 // pred_check_branch
        %163 = sbr.rel (%p160) target = $region12
      $region11: #{tpu_custom_call.1} parent=5 // pred_region
        %s164 = ssub.s32 %s14, 1
        // Predicated region
        $region13: #{tpu_custom_call.1} parent=11 // pred_check
          %p165 = pneg %p61
        $region14: #{tpu_custom_call.1} parent=11 // pred_check_branch
          %167 = sbr.rel (%p165) target = $region16
        $region15: #{tpu_custom_call.1} parent=11 // pred_region
          _
        $region16: #{tpu_custom_call.1} parent=11 // pred_fallthru
          _
        // Predicated region
        $region17: #{tpu_custom_call.1} parent=11 // pred_check
          %p168 = pneg %p82
        $region18: #{tpu_custom_call.1} parent=11 // pred_check_branch
          %170 = sbr.rel (%p168) target = $region20
        $region19: #{tpu_custom_call.1} parent=11 // pred_region
          _
        $region20: #{tpu_custom_call.1} parent=11 // pred_fallthru
          _
        // Predicated region
        $region21: #{tpu_custom_call.1} parent=11 // pred_check
          %p171 = pneg %p103
        $region22: #{tpu_custom_call.1} parent=11 // pred_check_branch
          %173 = sbr.rel (%p171) target = $region24
        $region23: #{tpu_custom_call.1} parent=11 // pred_region
          _
        $region24: #{tpu_custom_call.1} parent=11 // pred_fallthru
          _
        // Predicated region
        $region25: #{tpu_custom_call.1} parent=11 // pred_check
          %p174 = pneg %p124
        $region26: #{tpu_custom_call.1} parent=11 // pred_check_branch
          %176 = sbr.rel (%p174) target = $region28
        $region27: #{tpu_custom_call.1} parent=11 // pred_region
          _
        $region28: #{tpu_custom_call.1} parent=11 // pred_fallthru
          _
      $region12: #{tpu_custom_call.1} parent=5 // pred_fallthru
        _
      %p177 = scmp.lt.s32.totalorder %s14, 2
      // Predicated region
      $region29: #{tpu_custom_call.1} parent=5 // pred_check
        %p178 = pneg %p177
      $region30: #{tpu_custom_call.1} parent=5 // pred_check_branch
        %180 = sbr.rel (%p178) target = $region32
      $region31: #{tpu_custom_call.1} parent=5 // pred_region
        // Predicated region
        $region33: #{tpu_custom_call.1} parent=31 // pred_check
          %p181 = pneg %p34
        $region34: #{tpu_custom_call.1} parent=31 // pred_check_branch
          %183 = sbr.rel (%p181) target = $region36
        $region35: #{tpu_custom_call.1} parent=31 // pred_region
          %p184 = scmp.lt.s32.totalorder %s14, 1
          %s185 = scalar_select %p184, %s14, 1
          %s186 = smul.addr %s185, 8
          %s187 = scalar_lea.vmem %s0, %s186
        $region36: #{tpu_custom_call.1} parent=31 // pred_fallthru
          _
      $region32: #{tpu_custom_call.1} parent=5 // pred_fallthru
        _
      %p188 = scmp.le.s32.totalorder 1, %s14
      %p189 = scmp.lt.s32.totalorder %s14, 3
      %p190 = pnand %p188, %p189
      %p191 = pneg %p190
      // Predicated region
      $region37: #{tpu_custom_call.1} parent=5 // pred_check
        _
      $region38: #{tpu_custom_call.1} parent=5 // pred_check_branch
        %193 = sbr.rel (%p190) target = $region40
      $region39: #{tpu_custom_call.1} parent=5 // pred_region
        %s194 = ssub.s32 %s14, 1
        %p195 = scmp.lt.s32.totalorder %s19, 1
        %s196 = scalar_select %p195, %s19, 1
        %s197 = smul.addr %s196, 8
        %s198 = scalar_lea.vmem %s0, %s197
        %p199 = pneg %p40
        %p200 = pneg %p37
        %p201 = pneg %p61
        %p202 = pneg %p58
        %p203 = pneg %p82
        %p204 = pneg %p79
        %p205 = pneg %p103
        %p206 = pneg %p100
        %p207 = pneg %p124
        %p208 = pneg %p121
        %p209 = pneg %p150
        %p210 = pneg %p147
        %s211 = sand.u32 %s137, 1
        %s212 = scalar_lea.sflag [#allocation3], %s211
        %s213 = sand.u32 %s137, 1
        %s214 = smul.addr %s213, 8
        %s215 = scalar_lea.vmem [#allocation2], %s214
        %p216 = scmp.lt.s32.totalorder %s19, 1
        %s217 = scalar_select %p216, %s19, 1
        %s218 = smul.addr %s217, 8
        %s219 = scalar_lea.vmem %s0, %s218
        %v220 = vld [vmem:[%s219] sm:$0xff]
        %v221 = vld [vmem:[%s1] sm:$0xff]
        %v222 = vld [vmem:[%s1 + $0x8] sm:$0xff]
        %v223 = vld [vmem:[%s1 + $0x10] sm:$0xff]
        %v224 = vld [vmem:[%s1 + $0x18] sm:$0xff]
        %v225 = vld [vmem:[%s2] sm:$0x1]
        %v227 = vperm.slane %v225, 0
        %vm229 = vcmask 261120
        %v231 = vsel %vm229, %v220, 0
        %233 = vmatpush.msra.mxu0 0.0
        %234 = vmatpush.msra.mxu0 0.0
        %235 = vmatpush.msra.mxu0 0.0
        %236 = vmatpush.msra.mxu0 0.0
        %237 = vmatpush.msra.mxu0 0.0
        %238 = vmatpush.msra.mxu0 0.0
        %239 = vmatpush.msra.mxu0 0.0
        %240 = vmatpush.msra.mxu0 0.0
        %241 = vmatpush.msra.mxu0 0.0
        %242 = vmatpush.msra.mxu0 0.0
        %243 = vmatpush.msra.mxu0 0.0
        %244 = vmatpush.msra.mxu0 0.0
        %245 = vmatpush.msra.mxu0 %v224
        %246 = vmatpush.msra.mxu0 %v223
        %247 = vmatpush.msra.mxu0 %v222
        %248 = vmatpush.msra.mxu0 %v221
        %249 = vmatmul.f32.gmra.mxu0 %v231
        %v250 = vpop.f32.mrf.mxu0
        %v251 = vadd.f32 %v227, %v250
        %252 = vdwg.mxu0
        %v253 = vmax.f32 %v251, 0.0
        %v254 = vld [vmem:[%s3] sm:$0xff]
        %v255 = vld [vmem:[%s3 + $0x8] sm:$0xff]
        %v256 = vld [vmem:[%s3 + $0x10] sm:$0xff]
        %v257 = vld [vmem:[%s3 + $0x18] sm:$0xff]
        %v258 = vld [vmem:[%s3 + $0x20] sm:$0xff]
        %v259 = vld [vmem:[%s3 + $0x28] sm:$0xff]
        %v260 = vld [vmem:[%s3 + $0x30] sm:$0xff]
        %v261 = vld [vmem:[%s3 + $0x38] sm:$0xff]
        %v262 = vld [vmem:[%s3 + $0x40] sm:$0xff]
        %v263 = vld [vmem:[%s3 + $0x48] sm:$0xff]
        %v264 = vld [vmem:[%s3 + $0x50] sm:$0xff]
        %v265 = vld [vmem:[%s3 + $0x58] sm:$0xff]
        %v266 = vld [vmem:[%s3 + $0x60] sm:$0xff]
        %v267 = vld [vmem:[%s3 + $0x68] sm:$0xff]
        %v268 = vld [vmem:[%s3 + $0x70] sm:$0xff]
        %v269 = vld [vmem:[%s3 + $0x78] sm:$0xff]
        %v270 = vld [vmem:[%s4] sm:$0x1]
        %v272 = vperm.slane %v270, 0
        %274 = vmatpush.msra.mxu0 %v269
        %275 = vmatpush.msra.mxu0 %v268
        %276 = vmatpush.msra.mxu0 %v267
        %277 = vmatpush.msra.mxu0 %v266
        %278 = vmatpush.msra.mxu0 %v265
        %279 = vmatpush.msra.mxu0 %v264
        %280 = vmatpush.msra.mxu0 %v263
        %281 = vmatpush.msra.mxu0 %v262
        %282 = vmatpush.msra.mxu0 %v261
        %283 = vmatpush.msra.mxu0 %v260
        %284 = vmatpush.msra.mxu0 %v259
        %285 = vmatpush.msra.mxu0 %v258
        %286 = vmatpush.msra.mxu0 %v257
        %287 = vmatpush.msra.mxu0 %v256
        %288 = vmatpush.msra.mxu0 %v255
        %289 = vmatpush.msra.mxu0 %v254
        %290 = vmatmul.f32.gmra.mxu0 %v253
        %v291 = vpop.f32.mrf.mxu0
        %v292 = vadd.f32 %v272, %v291
        %293 = vdwg.mxu0
        %294 = vst.msk [vmem:[%s215] sm:$0xff] %vm229, %v292
        %s295 = sand.u32 %s137, 1
        %s296 = scalar_lea.sflag [#allocation3], %s295
        %s297 = sand.u32 %s137, 1
        %s298 = smul.addr %s297, 8
        %s299 = scalar_lea.vmem [#allocation2], %s298
        // Predicated region
        $region41: #{tpu_custom_call.1} parent=39 // pred_check
          %p300 = pneg %p147
        $region42: #{tpu_custom_call.1} parent=39 // pred_check_branch
          %302 = sbr.rel (%p300) target = $region44
        $region43: #{tpu_custom_call.1} parent=39 // pred_region
          %304 = vsyncadd %s296, 0
          %s305 = smul.addr %s19, 8
          %s306 = scalar_lea.hbm %s5, %s305
          %s308 = sshll.u32 %s299, 4
          %s309 = int_to_ptr.vmem [resolvable:$true] %s308
          %s310 = sshll.u32 %s306, 4
          %s311 = int_to_ptr.hbm [resolvable:$true] %s310
          %313 = dma.vmem_to_hbm [thread:$0]  %s309, 128, %s311, %s296
        $region44: #{tpu_custom_call.1} parent=39 // pred_fallthru
          _
      $region40: #{tpu_custom_call.1} parent=5 // pred_fallthru
        _
      %p314 = scmp.le.s32.totalorder 2, %s14
      // Predicated region
      $region45: #{tpu_custom_call.1} parent=5 // pred_check
        %p315 = pneg %p314
      $region46: #{tpu_custom_call.1} parent=5 // pred_check_branch
        %317 = sbr.rel (%p315) target = $region48
      $region47: #{tpu_custom_call.1} parent=5 // pred_region
        %s318 = ssub.s32 %s14, 2
        // Predicated region
        $region49: #{tpu_custom_call.1} parent=47 // pred_check
          %p319 = pneg %p153
        $region50: #{tpu_custom_call.1} parent=47 // pred_check_branch
          %321 = sbr.rel (%p319) target = $region52
        $region51: #{tpu_custom_call.1} parent=47 // pred_region
          %s322 = sand.u32 %s138, 1
          %s323 = scalar_lea.sflag [#allocation3], %s322
          %s324 = sand.u32 %s138, 1
          %s325 = smul.addr %s324, 8
          %s326 = scalar_lea.vmem [#allocation2], %s325
          %328 = dma.done %s323, 128
        $region52: #{tpu_custom_call.1} parent=47 // pred_fallthru
          _
      $region48: #{tpu_custom_call.1} parent=5 // pred_fallthru
        _
    $region6: #{tpu_custom_call.1} parent=1 // loop_footer
      %s18 = sadd.s32 1, %s14
    $region7: #{tpu_custom_call.1} parent=1 // loop_footer_branch
      %13 = sbr.rel target = $region3
    $region8: #{tpu_custom_call.1} parent=1 // loop_exit
      _
    %329 = vsyncpa [#allocation3], 1
    %s330 = scalar_lea.sflag [#allocation3], 1
    %331 = vsyncpa %s330, 1

</llo_original>
